<compile_context>
chip_gen: v6e
topology: v6e:2x2x1
jax: 0.10.0
libtpu: 0.0.40
codegen_flags: <defaults>
</compile_context>

<pallas_src>
import functools

import jax
import jax.numpy as jnp
from jax.experimental import pallas as pl
from jax.experimental.pallas import tpu as pltpu

_LANE = 128      # TPU lane width
_SUBLANE = 8     # f32 sublane width
_NEG_SLOPE = 0.01


def _round_up(x, m):
    return ((x + m - 1) // m) * m


def _leaky_relu(v):
    # f32 VPU math on every generation (v5e has no bf16 VALU).
    return jnp.where(v > 0, v, _NEG_SLOPE * v)


def net_kernel(x_ref,
               w1_ref, b1_ref,
               wh1_ref, bh1_ref,
               wh2_ref, bh2_ref,
               wh3_ref, bh3_ref,
               wh4_ref, bh4_ref,
               wh5_ref, bh5_ref,
               w2_ref, b2_ref,
               o_ref, *, compute_dtype, split_chains):
    """Full 7-layer MLP for one batch tile (all weights resident in VMEM)."""
    n_states = x_ref.shape[1]

    def fc1_vpu(xs):
        # fc1 has a tiny contraction (K = n_states): do it as K broadcast FMAs
        # on the VPU instead of paying a full MXU fill/drain at the head of the
        # strictly serial 7-layer chain.  All math in f32.
        w1 = w1_ref[...].astype(jnp.float32)
        y = b1_ref[...].astype(jnp.float32)            # (1, H) broadcasts over rows
        for k in range(n_states):                      # static, tiny unroll
            y = y + xs[:, k:k + 1] * w1[k:k + 1, :]
        return _leaky_relu(y).astype(compute_dtype)

    def hidden(h, w_ref, b_ref):
        # bf16 (or f32) operands on the MXU with f32 accumulation; f32 bias add
        # and LeakyReLU on the VPU, then cast back to the matmul dtype.
        y = jnp.dot(h, w_ref[...], preferred_element_type=jnp.float32)
        y = y + b_ref[...].astype(jnp.float32)
        return _leaky_relu(y).astype(compute_dtype)

    def chain(xs):
        h = fc1_vpu(xs.astype(jnp.float32))
        for w_ref, b_ref in ((wh1_ref, bh1_ref), (wh2_ref, bh2_ref),
                             (wh3_ref, bh3_ref), (wh4_ref, bh4_ref),
                             (wh5_ref, bh5_ref)):
            h = hidden(h, w_ref, b_ref)
        y = jnp.dot(h, w2_ref[...], preferred_element_type=jnp.float32)
        return y + b2_ref[...].astype(jnp.float32)     # fc2: no activation

    x = x_ref[...]
    if split_chains:
        # Two independent sub-tiles -> two independent dependency chains; the
        # LLO scheduler overlaps one chain's MXU drain with the other's push.
        half = x.shape[0] // 2                          # static, sublane-aligned
        o_ref[:half, :] = chain(x[:half]).astype(o_ref.dtype)
        o_ref[half:, :] = chain(x[half:]).astype(o_ref.dtype)
    else:
        o_ref[...] = chain(x).astype(o_ref.dtype)       # lane-dense (tile, 128) store


def prepare_params(params, *, use_bf16_matmul=True):
    """One-time parameter preprocessing (call when params are created/updated,
    NOT per forward call):
      * pad fc2's out-features to a full 128-lane slab (unmasked vst stores),
      * cast the MXU-side weights (fh1..fh5, fc2) to bf16 (native MXU dtype).
    Biases and the VPU-side fc1 weights stay f32.  Returns (prepared, n_actions).
    """
    (w1, b1, wh1, bh1, wh2, bh2, wh3, bh3, wh4, bh4, wh5, bh5, w2, b2) = params
    n_hidden, n_actions = w2.shape
    n_out_pad = _round_up(n_actions, _LANE)
    w2p = jnp.zeros((n_hidden, n_out_pad), jnp.float32).at[:, :n_actions].set(w2)
    b2p = jnp.zeros((1, n_out_pad), jnp.float32).at[:, :n_actions].set(b2)
    mm = jnp.bfloat16 if use_bf16_matmul else jnp.float32
    prepared = (w1.astype(jnp.float32), b1.astype(jnp.float32),
                wh1.astype(mm), bh1.astype(jnp.float32),
                wh2.astype(mm), bh2.astype(jnp.float32),
                wh3.astype(mm), bh3.astype(jnp.float32),
                wh4.astype(mm), bh4.astype(jnp.float32),
                wh5.astype(mm), bh5.astype(jnp.float32),
                w2p.astype(mm), b2p.astype(jnp.float32))
    return prepared, int(n_actions)


@functools.partial(jax.jit, static_argnames=("tile_b",))
def net_apply_padded(x, prepared, *, tile_b=None):
    """Runs the kernel and returns the lane-dense (b_pad, 128) Q-value slab.
    Rows [:x.shape[0]] / columns [:n_actions] hold the PyTorch output; consume
    the slab directly (e.g. argmax) to avoid an extra slice copy per call."""
    B, n_states = x.shape
    n_hidden = prepared[2].shape[0]
    n_out_pad = prepared[-1].shape[1]
    compute_dtype = jnp.dtype(prepared[2].dtype)       # bf16 or f32 MXU path

    if tile_b is None:
        # bf16 activations halve vreg footprint, allowing a bigger tile.
        tile_b = 1024 if compute_dtype == jnp.bfloat16 else 512

    # ---- tile / grid selection -------------------------------------------
    b8 = _round_up(B, _SUBLANE)
    if b8 >= 2 * _LANE:
        # >= 2 grid steps, each tile a multiple of 128 rows: keeps both v7x
        # TensorCores busy on the "parallel" axis and avoids ragged MXU passes;
        # costs v5e/v6e at most one extra ~0.35us grid step.
        tile = min(_round_up(pl.cdiv(b8, 2), _LANE), _round_up(tile_b, _LANE))
    else:
        tile = b8                                       # small batch: one tile
    b_pad = _round_up(b8, tile)
    grid = (b_pad // tile,)
    split_chains = (tile >= 16) and (tile % 16 == 0)    # halves stay sublane-aligned

    if b_pad != B:
        x = jnp.pad(x, ((0, b_pad - B), (0, 0)))

    # ---- specs -------------------------------------------------------------
    x_spec = pl.BlockSpec((tile, n_states), lambda i: (i, 0))
    out_spec = pl.BlockSpec((tile, n_out_pad), lambda i: (i, 0))
    # All params are rank-2, grid-invariant: full array in VMEM, constant (0,0)
    # block index -> DMA'd once for the whole grid.
    param_specs = [pl.BlockSpec(p.shape, lambda i: (0, 0)) for p in prepared]

    flops = 2 * b_pad * (n_states * n_hidden
                         + 5 * n_hidden * n_hidden
                         + n_hidden * n_out_pad)
    param_bytes = sum(int(p.size) * p.dtype.itemsize for p in prepared)
    bytes_accessed = (int(x.size) * x.dtype.itemsize
                      + b_pad * n_out_pad * 4
                      + param_bytes)

    out = pl.pallas_call(
        functools.partial(net_kernel, compute_dtype=compute_dtype,
                          split_chains=split_chains),
        out_shape=jax.ShapeDtypeStruct((b_pad, n_out_pad), jnp.float32),
        grid_spec=pltpu.PrefetchScalarGridSpec(
            num_scalar_prefetch=0,
            grid=grid,
            in_specs=[x_spec] + param_specs,
            out_specs=out_spec,
        ),
        compiler_params=pltpu.CompilerParams(
            dimension_semantics=("parallel",)),         # batch tiles shard across v7x TCs
        cost_estimate=pl.CostEstimate(
            flops=flops, transcendentals=0, bytes_accessed=bytes_accessed),
    )(x, *prepared)
    return out


@functools.partial(jax.jit, static_argnames=("n_actions", "tile_b"))
def net_forward(x, prepared, *, n_actions, tile_b=None):
    """Exact PyTorch-shaped output (B, n_actions).  Prefer net_apply_padded in
    a DQN loop and consume the padded slab directly to skip this slice copy."""
    out = net_apply_padded(x, prepared, tile_b=tile_b)
    return out[:x.shape[0], :n_actions]


# ---------------------------- init & reference --------------------------------
def init_linear(key, fan_in, fan_out):
    """Matches PyTorch nn.Linear default init: U(-1/sqrt(fan_in), +1/sqrt(fan_in))."""
    kw, kb = jax.random.split(key)
    bound = 1.0 / jnp.sqrt(jnp.float32(fan_in))
    w = jax.random.uniform(kw, (fan_in, fan_out), jnp.float32, -bound, bound)
    b = jax.random.uniform(kb, (1, fan_out), jnp.float32, -bound, bound)
    return w, b


def init_net_params(key, n_states, n_hidden, n_actions):
    keys = jax.random.split(key, 7)
    dims = [(n_states, n_hidden)] + [(n_hidden, n_hidden)] * 5 + [(n_hidden, n_actions)]
    layers = []
    for k, (fi, fo) in zip(keys, dims):
        layers.extend(init_linear(k, fi, fo))
    return tuple(layers)


def net_reference(x, params, mm_dtype=jnp.bfloat16):
    """Plain-JAX reference matching the kernel's dtype strategy: fc1, biases and
    LeakyReLU in f32; hidden/fc2 matmuls with mm_dtype operands, f32 accum."""
    (w1, b1, wh1, bh1, wh2, bh2, wh3, bh3, wh4, bh4, wh5, bh5, w2, b2) = params
    hi = jax.lax.Precision.HIGHEST
    h = jnp.dot(x, w1, precision=hi, preferred_element_type=jnp.float32) + b1
    h = _leaky_relu(h).astype(mm_dtype)
    for w, b in ((wh1, bh1), (wh2, bh2), (wh3, bh3), (wh4, bh4), (wh5, bh5)):
        y = jnp.dot(h, w.astype(mm_dtype), precision=hi,
                    preferred_element_type=jnp.float32) + b
        h = _leaky_relu(y).astype(mm_dtype)
    return jnp.dot(h, w2.astype(mm_dtype), precision=hi,
                   preferred_element_type=jnp.float32) + b2


if __name__ == "__main__":
    n_states, n_hidden, n_actions = 4, 32, 2

    key = jax.random.PRNGKey(0)
    k_params, k_x1, k_x2 = jax.random.split(key, 3)
    params = init_net_params(k_params, n_states, n_hidden, n_actions)

    # One-time parameter preprocessing, hoisted out of the forward path.
    prep_bf16, n_act = prepare_params(params, use_bf16_matmul=True)   # default MXU path
    prep_f32, _ = prepare_params(params, use_bf16_matmul=False)

    # 1) Small batch, f32 path, single grid step.
    x_small = jax.random.normal(k_x1, (8, n_states), jnp.float32)
    out_small = jax.block_until_ready(net_forward(x_small, prep_f32, n_actions=n_act))
    ref_small = net_reference(x_small, params, mm_dtype=jnp.float32)
    assert out_small.shape == (8, n_actions)
    assert jnp.allclose(out_small, ref_small, atol=1e-4, rtol=1e-4)

    # 2) Larger batch, default bf16 path: 1000 rows -> 2 "parallel" grid steps
    #    of 512 rows each (keeps both v7x TCs busy), split-chain interleave.
    x_big = jax.random.normal(k_x2, (1000, n_states), jnp.float32)
    out_big = jax.block_until_ready(net_forward(x_big, prep_bf16, n_actions=n_act))
    ref_big = net_reference(x_big, params, mm_dtype=jnp.bfloat16)
    assert out_big.shape == (1000, n_actions)
    assert jnp.allclose(out_big, ref_big, atol=5e-3, rtol=5e-3)

    # 3) Lane-dense padded slab consumed directly (no per-call slice copy).
    slab = jax.block_until_ready(net_apply_padded(x_big, prep_bf16))
    assert slab.shape[1] == 128
    assert jnp.allclose(slab[:1000, :n_act], ref_big, atol=5e-3, rtol=5e-3)
    _ = jnp.argmax(slab[:, :n_act], axis=-1)   # greedy actions straight off the slab

    print("KERNEL_OK")
</pallas_src>

<mosaic_0001>
module attributes {stable_mosaic.version = 11 : i64} {
  func.func @net_kernel(%arg0: i32, %arg1: memref<8x4xf32, #tpu.memory_space<vmem>>, %arg2: memref<4x32xf32, #tpu.memory_space<vmem>>, %arg3: memref<1x32xf32, #tpu.memory_space<vmem>>, %arg4: memref<32x32xf32, #tpu.memory_space<vmem>>, %arg5: memref<1x32xf32, #tpu.memory_space<vmem>>, %arg6: memref<32x32xf32, #tpu.memory_space<vmem>>, %arg7: memref<1x32xf32, #tpu.memory_space<vmem>>, %arg8: memref<32x32xf32, #tpu.memory_space<vmem>>, %arg9: memref<1x32xf32, #tpu.memory_space<vmem>>, %arg10: memref<32x32xf32, #tpu.memory_space<vmem>>, %arg11: memref<1x32xf32, #tpu.memory_space<vmem>>, %arg12: memref<32x32xf32, #tpu.memory_space<vmem>>, %arg13: memref<1x32xf32, #tpu.memory_space<vmem>>, %arg14: memref<32x128xf32, #tpu.memory_space<vmem>>, %arg15: memref<1x128xf32, #tpu.memory_space<vmem>>, %arg16: memref<8x128xf32, #tpu.memory_space<vmem>>) attributes {dimension_semantics = [#tpu.dimension_semantics<parallel>], iteration_bounds = array<i64: 1>, scalar_prefetch = 0 : i64, scratch_operands = 0 : i64, tpu.core_type = #tpu.core_type<tc>, window_params = [{transform_indices = @transform_0, window_bounds = array<i64: 8, 4>}, {pipeline_mode = #tpu.pipeline_mode<synchronous>, transform_indices = @transform_1, window_bounds = array<i64: 4, 32>}, {pipeline_mode = #tpu.pipeline_mode<synchronous>, transform_indices = @transform_2, window_bounds = array<i64: 1, 32>}, {pipeline_mode = #tpu.pipeline_mode<synchronous>, transform_indices = @transform_3, window_bounds = array<i64: 32, 32>}, {pipeline_mode = #tpu.pipeline_mode<synchronous>, transform_indices = @transform_4, window_bounds = array<i64: 1, 32>}, {pipeline_mode = #tpu.pipeline_mode<synchronous>, transform_indices = @transform_5, window_bounds = array<i64: 32, 32>}, {pipeline_mode = #tpu.pipeline_mode<synchronous>, transform_indices = @transform_6, window_bounds = array<i64: 1, 32>}, {pipeline_mode = #tpu.pipeline_mode<synchronous>, transform_indices = @transform_7, window_bounds = array<i64: 32, 32>}, {pipeline_mode = #tpu.pipeline_mode<synchronous>, transform_indices = @transform_8, window_bounds = array<i64: 1, 32>}, {pipeline_mode = #tpu.pipeline_mode<synchronous>, transform_indices = @transform_9, window_bounds = array<i64: 32, 32>}, {pipeline_mode = #tpu.pipeline_mode<synchronous>, transform_indices = @transform_10, window_bounds = array<i64: 1, 32>}, {pipeline_mode = #tpu.pipeline_mode<synchronous>, transform_indices = @transform_11, window_bounds = array<i64: 32, 32>}, {pipeline_mode = #tpu.pipeline_mode<synchronous>, transform_indices = @transform_12, window_bounds = array<i64: 1, 32>}, {pipeline_mode = #tpu.pipeline_mode<synchronous>, transform_indices = @transform_13, window_bounds = array<i64: 32, 128>}, {pipeline_mode = #tpu.pipeline_mode<synchronous>, transform_indices = @transform_14, window_bounds = array<i64: 1, 128>}, {transform_indices = @transform_15, window_bounds = array<i64: 8, 128>}]} {
    %c0 = arith.constant 0 : index
    %c0_0 = arith.constant 0 : index
    %0 = vector.load %arg1[%c0, %c0_0] : memref<8x4xf32, #tpu.memory_space<vmem>>, vector<8x4xf32>
    %c0_1 = arith.constant 0 : index
    %c0_2 = arith.constant 0 : index
    %1 = vector.load %arg2[%c0_1, %c0_2] : memref<4x32xf32, #tpu.memory_space<vmem>>, vector<4x32xf32>
    %c0_3 = arith.constant 0 : index
    %c0_4 = arith.constant 0 : index
    %2 = vector.load %arg3[%c0_3, %c0_4] : memref<1x32xf32, #tpu.memory_space<vmem>>, vector<1x32xf32>
    %3 = vector.extract_strided_slice %0 {offsets = [0, 0], sizes = [8, 1], strides = [1, 1]} : vector<8x4xf32> to vector<8x1xf32>
    %4 = vector.extract_strided_slice %1 {offsets = [0, 0], sizes = [1, 32], strides = [1, 1]} : vector<4x32xf32> to vector<1x32xf32>
    %5 = vector.broadcast %3 : vector<8x1xf32> to vector<8x32xf32>
    %6 = vector.broadcast %4 : vector<1x32xf32> to vector<8x32xf32>
    %7 = arith.mulf %5, %6 : vector<8x32xf32>
    %8 = vector.broadcast %2 : vector<1x32xf32> to vector<8x32xf32>
    %9 = arith.addf %8, %7 : vector<8x32xf32>
    %10 = vector.extract_strided_slice %0 {offsets = [0, 1], sizes = [8, 1], strides = [1, 1]} : vector<8x4xf32> to vector<8x1xf32>
    %11 = vector.extract_strided_slice %1 {offsets = [1, 0], sizes = [1, 32], strides = [1, 1]} : vector<4x32xf32> to vector<1x32xf32>
    %12 = vector.broadcast %10 : vector<8x1xf32> to vector<8x32xf32>
    %13 = vector.broadcast %11 : vector<1x32xf32> to vector<8x32xf32>
    %14 = arith.mulf %12, %13 : vector<8x32xf32>
    %15 = arith.addf %9, %14 : vector<8x32xf32>
    %16 = vector.extract_strided_slice %0 {offsets = [0, 2], sizes = [8, 1], strides = [1, 1]} : vector<8x4xf32> to vector<8x1xf32>
    %17 = vector.extract_strided_slice %1 {offsets = [2, 0], sizes = [1, 32], strides = [1, 1]} : vector<4x32xf32> to vector<1x32xf32>
    %18 = vector.broadcast %16 : vector<8x1xf32> to vector<8x32xf32>
    %19 = vector.broadcast %17 : vector<1x32xf32> to vector<8x32xf32>
    %20 = arith.mulf %18, %19 : vector<8x32xf32>
    %21 = arith.addf %15, %20 : vector<8x32xf32>
    %22 = vector.extract_strided_slice %0 {offsets = [0, 3], sizes = [8, 1], strides = [1, 1]} : vector<8x4xf32> to vector<8x1xf32>
    %23 = vector.extract_strided_slice %1 {offsets = [3, 0], sizes = [1, 32], strides = [1, 1]} : vector<4x32xf32> to vector<1x32xf32>
    %24 = vector.broadcast %22 : vector<8x1xf32> to vector<8x32xf32>
    %25 = vector.broadcast %23 : vector<1x32xf32> to vector<8x32xf32>
    %26 = arith.mulf %24, %25 : vector<8x32xf32>
    %27 = arith.addf %21, %26 : vector<8x32xf32>
    %cst = arith.constant 0.000000e+00 : f32
    %28 = vector.broadcast %cst : f32 to vector<8x32xf32>
    %29 = arith.cmpf ogt, %27, %28 : vector<8x32xf32>
    %cst_5 = arith.constant 0.00999999977 : f32
    %30 = vector.broadcast %cst_5 : f32 to vector<8x32xf32>
    %31 = arith.mulf %30, %27 : vector<8x32xf32>
    %32 = arith.select %29, %27, %31 : vector<8x32xi1>, vector<8x32xf32>
    %c0_6 = arith.constant 0 : index
    %c0_7 = arith.constant 0 : index
    %33 = vector.load %arg4[%c0_6, %c0_7] : memref<32x32xf32, #tpu.memory_space<vmem>>, vector<32x32xf32>
    %cst_8 = arith.constant dense<0.000000e+00> : vector<8x32xf32>
    %34 = tpu.matmul %32, %33, %cst_8 {dimension_numbers = #tpu.dot_dimension_numbers<[1], [0], [0], [1], [0, 0, 1, 1], [], []>} : vector<8x32xf32>, vector<32x32xf32>, vector<8x32xf32> -> vector<8x32xf32>
    %c0_9 = arith.constant 0 : index
    %c0_10 = arith.constant 0 : index
    %35 = vector.load %arg5[%c0_9, %c0_10] : memref<1x32xf32, #tpu.memory_space<vmem>>, vector<1x32xf32>
    %36 = vector.broadcast %35 : vector<1x32xf32> to vector<8x32xf32>
    %37 = arith.addf %34, %36 : vector<8x32xf32>
    %cst_11 = arith.constant 0.000000e+00 : f32
    %38 = vector.broadcast %cst_11 : f32 to vector<8x32xf32>
    %39 = arith.cmpf ogt, %37, %38 : vector<8x32xf32>
    %cst_12 = arith.constant 0.00999999977 : f32
    %40 = vector.broadcast %cst_12 : f32 to vector<8x32xf32>
    %41 = arith.mulf %40, %37 : vector<8x32xf32>
    %42 = arith.select %39, %37, %41 : vector<8x32xi1>, vector<8x32xf32>
    %c0_13 = arith.constant 0 : index
    %c0_14 = arith.constant 0 : index
    %43 = vector.load %arg6[%c0_13, %c0_14] : memref<32x32xf32, #tpu.memory_space<vmem>>, vector<32x32xf32>
    %cst_15 = arith.constant dense<0.000000e+00> : vector<8x32xf32>
    %44 = tpu.matmul %42, %43, %cst_15 {dimension_numbers = #tpu.dot_dimension_numbers<[1], [0], [0], [1], [0, 0, 1, 1], [], []>} : vector<8x32xf32>, vector<32x32xf32>, vector<8x32xf32> -> vector<8x32xf32>
    %c0_16 = arith.constant 0 : index
    %c0_17 = arith.constant 0 : index
    %45 = vector.load %arg7[%c0_16, %c0_17] : memref<1x32xf32, #tpu.memory_space<vmem>>, vector<1x32xf32>
    %46 = vector.broadcast %45 : vector<1x32xf32> to vector<8x32xf32>
    %47 = arith.addf %44, %46 : vector<8x32xf32>
    %cst_18 = arith.constant 0.000000e+00 : f32
    %48 = vector.broadcast %cst_18 : f32 to vector<8x32xf32>
    %49 = arith.cmpf ogt, %47, %48 : vector<8x32xf32>
    %cst_19 = arith.constant 0.00999999977 : f32
    %50 = vector.broadcast %cst_19 : f32 to vector<8x32xf32>
    %51 = arith.mulf %50, %47 : vector<8x32xf32>
    %52 = arith.select %49, %47, %51 : vector<8x32xi1>, vector<8x32xf32>
    %c0_20 = arith.constant 0 : index
    %c0_21 = arith.constant 0 : index
    %53 = vector.load %arg8[%c0_20, %c0_21] : memref<32x32xf32, #tpu.memory_space<vmem>>, vector<32x32xf32>
    %cst_22 = arith.constant dense<0.000000e+00> : vector<8x32xf32>
    %54 = tpu.matmul %52, %53, %cst_22 {dimension_numbers = #tpu.dot_dimension_numbers<[1], [0], [0], [1], [0, 0, 1, 1], [], []>} : vector<8x32xf32>, vector<32x32xf32>, vector<8x32xf32> -> vector<8x32xf32>
    %c0_23 = arith.constant 0 : index
    %c0_24 = arith.constant 0 : index
    %55 = vector.load %arg9[%c0_23, %c0_24] : memref<1x32xf32, #tpu.memory_space<vmem>>, vector<1x32xf32>
    %56 = vector.broadcast %55 : vector<1x32xf32> to vector<8x32xf32>
    %57 = arith.addf %54, %56 : vector<8x32xf32>
    %cst_25 = arith.constant 0.000000e+00 : f32
    %58 = vector.broadcast %cst_25 : f32 to vector<8x32xf32>
    %59 = arith.cmpf ogt, %57, %58 : vector<8x32xf32>
    %cst_26 = arith.constant 0.00999999977 : f32
    %60 = vector.broadcast %cst_26 : f32 to vector<8x32xf32>
    %61 = arith.mulf %60, %57 : vector<8x32xf32>
    %62 = arith.select %59, %57, %61 : vector<8x32xi1>, vector<8x32xf32>
    %c0_27 = arith.constant 0 : index
    %c0_28 = arith.constant 0 : index
    %63 = vector.load %arg10[%c0_27, %c0_28] : memref<32x32xf32, #tpu.memory_space<vmem>>, vector<32x32xf32>
    %cst_29 = arith.constant dense<0.000000e+00> : vector<8x32xf32>
    %64 = tpu.matmul %62, %63, %cst_29 {dimension_numbers = #tpu.dot_dimension_numbers<[1], [0], [0], [1], [0, 0, 1, 1], [], []>} : vector<8x32xf32>, vector<32x32xf32>, vector<8x32xf32> -> vector<8x32xf32>
    %c0_30 = arith.constant 0 : index
    %c0_31 = arith.constant 0 : index
    %65 = vector.load %arg11[%c0_30, %c0_31] : memref<1x32xf32, #tpu.memory_space<vmem>>, vector<1x32xf32>
    %66 = vector.broadcast %65 : vector<1x32xf32> to vector<8x32xf32>
    %67 = arith.addf %64, %66 : vector<8x32xf32>
    %cst_32 = arith.constant 0.000000e+00 : f32
    %68 = vector.broadcast %cst_32 : f32 to vector<8x32xf32>
    %69 = arith.cmpf ogt, %67, %68 : vector<8x32xf32>
    %cst_33 = arith.constant 0.00999999977 : f32
    %70 = vector.broadcast %cst_33 : f32 to vector<8x32xf32>
    %71 = arith.mulf %70, %67 : vector<8x32xf32>
    %72 = arith.select %69, %67, %71 : vector<8x32xi1>, vector<8x32xf32>
    %c0_34 = arith.constant 0 : index
    %c0_35 = arith.constant 0 : index
    %73 = vector.load %arg12[%c0_34, %c0_35] : memref<32x32xf32, #tpu.memory_space<vmem>>, vector<32x32xf32>
    %cst_36 = arith.constant dense<0.000000e+00> : vector<8x32xf32>
    %74 = tpu.matmul %72, %73, %cst_36 {dimension_numbers = #tpu.dot_dimension_numbers<[1], [0], [0], [1], [0, 0, 1, 1], [], []>} : vector<8x32xf32>, vector<32x32xf32>, vector<8x32xf32> -> vector<8x32xf32>
    %c0_37 = arith.constant 0 : index
    %c0_38 = arith.constant 0 : index
    %75 = vector.load %arg13[%c0_37, %c0_38] : memref<1x32xf32, #tpu.memory_space<vmem>>, vector<1x32xf32>
    %76 = vector.broadcast %75 : vector<1x32xf32> to vector<8x32xf32>
    %77 = arith.addf %74, %76 : vector<8x32xf32>
    %cst_39 = arith.constant 0.000000e+00 : f32
    %78 = vector.broadcast %cst_39 : f32 to vector<8x32xf32>
    %79 = arith.cmpf ogt, %77, %78 : vector<8x32xf32>
    %cst_40 = arith.constant 0.00999999977 : f32
    %80 = vector.broadcast %cst_40 : f32 to vector<8x32xf32>
    %81 = arith.mulf %80, %77 : vector<8x32xf32>
    %82 = arith.select %79, %77, %81 : vector<8x32xi1>, vector<8x32xf32>
    %c0_41 = arith.constant 0 : index
    %c0_42 = arith.constant 0 : index
    %83 = vector.load %arg14[%c0_41, %c0_42] : memref<32x128xf32, #tpu.memory_space<vmem>>, vector<32x128xf32>
    %cst_43 = arith.constant dense<0.000000e+00> : vector<8x128xf32>
    %84 = tpu.matmul %82, %83, %cst_43 {dimension_numbers = #tpu.dot_dimension_numbers<[1], [0], [0], [1], [0, 0, 1, 1], [], []>} : vector<8x32xf32>, vector<32x128xf32>, vector<8x128xf32> -> vector<8x128xf32>
    %c0_44 = arith.constant 0 : index
    %c0_45 = arith.constant 0 : index
    %85 = vector.load %arg15[%c0_44, %c0_45] : memref<1x128xf32, #tpu.memory_space<vmem>>, vector<1x128xf32>
    %86 = vector.broadcast %85 : vector<1x128xf32> to vector<8x128xf32>
    %87 = arith.addf %84, %86 : vector<8x128xf32>
    %c0_46 = arith.constant 0 : index
    %c0_47 = arith.constant 0 : index
    %88 = vector.load %arg16[%c0_46, %c0_47] : memref<8x128xf32, #tpu.memory_space<vmem>>, vector<8x128xf32>
    tpu.vector_store %arg16[%c0_46, %c0_47], %87 {strides = array<i32>} : memref<8x128xf32, #tpu.memory_space<vmem>>, vector<8x128xf32>,
    return
  }
  func.func @transform_0(%arg0: i32) -> (i32, i32) {
    %c0_i32 = arith.constant 0 : i32
    %c0_i32_0 = arith.constant 0 : i32
    return %arg0, %c0_i32 : i32, i32
  }
  func.func @transform_1(%arg0: i32) -> (i32, i32) {
    %c0_i32 = arith.constant 0 : i32
    %c0_i32_0 = arith.constant 0 : i32
    %c0_i32_1 = arith.constant 0 : i32
    return %c0_i32, %c0_i32_0 : i32, i32
  }
  func.func @transform_2(%arg0: i32) -> (i32, i32) {
    %c0_i32 = arith.constant 0 : i32
    %c0_i32_0 = arith.constant 0 : i32
    %c0_i32_1 = arith.constant 0 : i32
    return %c0_i32, %c0_i32_0 : i32, i32
  }
  func.func @transform_3(%arg0: i32) -> (i32, i32) {
    %c0_i32 = arith.constant 0 : i32
    %c0_i32_0 = arith.constant 0 : i32
    %c0_i32_1 = arith.constant 0 : i32
    return %c0_i32, %c0_i32_0 : i32, i32
  }
  func.func @transform_4(%arg0: i32) -> (i32, i32) {
    %c0_i32 = arith.constant 0 : i32
    %c0_i32_0 = arith.constant 0 : i32
    %c0_i32_1 = arith.constant 0 : i32
    return %c0_i32, %c0_i32_0 : i32, i32
  }
  func.func @transform_5(%arg0: i32) -> (i32, i32) {
    %c0_i32 = arith.constant 0 : i32
    %c0_i32_0 = arith.constant 0 : i32
    %c0_i32_1 = arith.constant 0 : i32
    return %c0_i32, %c0_i32_0 : i32, i32
  }
  func.func @transform_6(%arg0: i32) -> (i32, i32) {
    %c0_i32 = arith.constant 0 : i32
    %c0_i32_0 = arith.constant 0 : i32
    %c0_i32_1 = arith.constant 0 : i32
    return %c0_i32, %c0_i32_0 : i32, i32
  }
  func.func @transform_7(%arg0: i32) -> (i32, i32) {
    %c0_i32 = arith.constant 0 : i32
    %c0_i32_0 = arith.constant 0 : i32
    %c0_i32_1 = arith.constant 0 : i32
    return %c0_i32, %c0_i32_0 : i32, i32
  }
  func.func @transform_8(%arg0: i32) -> (i32, i32) {
    %c0_i32 = arith.constant 0 : i32
    %c0_i32_0 = arith.constant 0 : i32
    %c0_i32_1 = arith.constant 0 : i32
    return %c0_i32, %c0_i32_0 : i32, i32
  }
  func.func @transform_9(%arg0: i32) -> (i32, i32) {
    %c0_i32 = arith.constant 0 : i32
    %c0_i32_0 = arith.constant 0 : i32
    %c0_i32_1 = arith.constant 0 : i32
    return %c0_i32, %c0_i32_0 : i32, i32
  }
  func.func @transform_10(%arg0: i32) -> (i32, i32) {
    %c0_i32 = arith.constant 0 : i32
    %c0_i32_0 = arith.constant 0 : i32
    %c0_i32_1 = arith.constant 0 : i32
    return %c0_i32, %c0_i32_0 : i32, i32
  }
  func.func @transform_11(%arg0: i32) -> (i32, i32) {
    %c0_i32 = arith.constant 0 : i32
    %c0_i32_0 = arith.constant 0 : i32
    %c0_i32_1 = arith.constant 0 : i32
    return %c0_i32, %c0_i32_0 : i32, i32
  }
  func.func @transform_12(%arg0: i32) -> (i32, i32) {
    %c0_i32 = arith.constant 0 : i32
    %c0_i32_0 = arith.constant 0 : i32
    %c0_i32_1 = arith.constant 0 : i32
    return %c0_i32, %c0_i32_0 : i32, i32
  }
  func.func @transform_13(%arg0: i32) -> (i32, i32) {
    %c0_i32 = arith.constant 0 : i32
    %c0_i32_0 = arith.constant 0 : i32
    %c0_i32_1 = arith.constant 0 : i32
    return %c0_i32, %c0_i32_0 : i32, i32
  }
  func.func @transform_14(%arg0: i32) -> (i32, i32) {
    %c0_i32 = arith.constant 0 : i32
    %c0_i32_0 = arith.constant 0 : i32
    %c0_i32_1 = arith.constant 0 : i32
    return %c0_i32, %c0_i32_0 : i32, i32
  }
  func.func @transform_15(%arg0: i32) -> (i32, i32) {
    %c0_i32 = arith.constant 0 : i32
    %c0_i32_0 = arith.constant 0 : i32
    return %arg0, %c0_i32 : i32, i32
  }
}

</mosaic_0001>

<llo_original>
// kernel: net_apply_padded.1
$region0: #{net_apply_padded.1}
  #allocation0 [shape = 'u32[]', space=smem, size = 0x4, offset = 0x4, fixed_abs, tag = 'smem constant byte address 0x4 - core index']
  #allocation1 [shape = 'u32[144,128]{1,0:T(1,128)}', space=vmem, size = 0x12000, scoped, tag = 'internal scratch']
  %s0 = inlined_call_operand.vmem [shape: f32[8,4], index: 0, kind: input, shape index: {}]
  %s1 = inlined_call_operand.hbm [shape: f32[4,32], index: 1, kind: input, shape index: {}]
  %s2 = inlined_call_operand.hbm [shape: f32[1,32], index: 2, kind: input, shape index: {}]
  %s3 = inlined_call_operand.hbm [shape: f32[32,32], index: 3, kind: input, shape index: {}]
  %s4 = inlined_call_operand.hbm [shape: f32[1,32], index: 4, kind: input, shape index: {}]
  %s5 = inlined_call_operand.hbm [shape: f32[32,32], index: 5, kind: input, shape index: {}]
  %s6 = inlined_call_operand.hbm [shape: f32[1,32], index: 6, kind: input, shape index: {}]
  %s7 = inlined_call_operand.hbm [shape: f32[32,32], index: 7, kind: input, shape index: {}]
  %s8 = inlined_call_operand.hbm [shape: f32[1,32], index: 8, kind: input, shape index: {}]
  %s9 = inlined_call_operand.hbm [shape: f32[32,32], index: 9, kind: input, shape index: {}]
  %s10 = inlined_call_operand.hbm [shape: f32[1,32], index: 10, kind: input, shape index: {}]
  %s11 = inlined_call_operand.vmem [shape: f32[32,32], index: 11, kind: input, shape index: {}]
  %s12 = inlined_call_operand.vmem [shape: f32[1,32], index: 12, kind: input, shape index: {}]
  %s13 = inlined_call_operand.hbm [shape: f32[32,128], index: 13, kind: input, shape index: {}]
  %s14 = inlined_call_operand.vmem [shape: f32[1,128], index: 14, kind: input, shape index: {}]
  %s15 = inlined_call_operand.hbm [shape: f32[8,128], index: 15, kind: output, shape index: {}]
  %s16 = sld [smem:[#allocation0]]
  $region114: #{net_apply_padded.1} parent=0
    _
  %s18 = ssub.s32 1, %s16
  %s19 = scalar_select 0, %s18, %s16
  $region1: #{net_apply_padded.1} parent=0
    #allocation2 [shape = 'u8[2048]{0}', space=vmem, size = 0x800, scoped, tag = 'input window, operand 1, single buffered']
    #allocation3 [shape = 's32[1]{0}', space=sflag, size = 0x4, scoped, tag = 'scoped memory for net_apply_padded.1']
    #allocation4 [shape = 's32[1]{0}', space=sflag, size = 0x4, scoped, tag = 'scoped memory for net_apply_padded.1']
    #allocation5 [shape = 'u8[512]{0}', space=vmem, size = 0x400, scoped, tag = 'input window, operand 2, single buffered']
    #allocation6 [shape = 's32[1]{0}', space=sflag, size = 0x4, scoped, tag = 'scoped memory for net_apply_padded.1']
    #allocation7 [shape = 'u8[16384]{0}', space=vmem, size = 0x4000, scoped, tag = 'input window, operand 3, single buffered']
    #allocation8 [shape = 'u8[512]{0}', space=vmem, size = 0x400, scoped, tag = 'input window, operand 4, single buffered']
    #allocation9 [shape = 's32[1]{0}', space=sflag, size = 0x4, scoped, tag = 'scoped memory for net_apply_padded.1']
    #allocation10 [shape = 'u8[16384]{0}', space=vmem, size = 0x4000, scoped, tag = 'input window, operand 5, single buffered']
    #allocation11 [shape = 'u8[512]{0}', space=vmem, size = 0x400, scoped, tag = 'input window, operand 6, single buffered']
    #allocation12 [shape = 's32[1]{0}', space=sflag, size = 0x4, scoped, tag = 'scoped memory for net_apply_padded.1']
    #allocation13 [shape = 'u8[16384]{0}', space=vmem, size = 0x4000, scoped, tag = 'input window, operand 7, single buffered']
    #allocation14 [shape = 'u8[512]{0}', space=vmem, size = 0x400, scoped, tag = 'input window, operand 8, single buffered']
    #allocation15 [shape = 's32[1]{0}', space=sflag, size = 0x4, scoped, tag = 'scoped memory for net_apply_padded.1']
    #allocation16 [shape = 'u8[16384]{0}', space=vmem, size = 0x4000, scoped, tag = 'input window, operand 9, single buffered']
    #allocation17 [shape = 'u8[512]{0}', space=vmem, size = 0x400, scoped, tag = 'input window, operand 10, single buffered']
    #allocation18 [shape = 's32[1]{0}', space=sflag, size = 0x4, scoped, tag = 'scoped memory for net_apply_padded.1']
    #allocation19 [shape = 'u8[16384]{0}', space=vmem, size = 0x4000, scoped, tag = 'input window, operand 13, single buffered']
    #allocation20 [shape = 'u8[4096]{0}', space=vmem, size = 0x1000, scoped, tag = 'output window, operand 0, single buffered']
    %20 = vsyncpa [#allocation3], 0
    %21 = vsyncpa [#allocation6], 0
    %22 = vsyncpa [#allocation9], 0
    %23 = vsyncpa [#allocation12], 0
    %24 = vsyncpa [#allocation15], 0
    %25 = vsyncpa [#allocation18], 0
    %26 = vsyncpa [#allocation4], 0
    // Predicated region
    $region2: #{net_apply_padded.1} parent=1 // pred_check
      _
    $region3: #{net_apply_padded.1} parent=1 // pred_check_branch
      %28 = sbr.rel (0) target = $region5
    $region4: #{net_apply_padded.1} parent=1 // pred_region
      _
    $region5: #{net_apply_padded.1} parent=1 // pred_fallthru
      _
    // Predicated region
    $region6: #{net_apply_padded.1} parent=1 // pred_check
      _
    $region7: #{net_apply_padded.1} parent=1 // pred_check_branch
      %30 = sbr.rel (0) target = $region9
    $region8: #{net_apply_padded.1} parent=1 // pred_region
      %s32 = ssub.s32 64, 64
      %33 = vsyncadd [#allocation3], %s32
      %s35 = sshll.u32 [#allocation2], 4
      %s36 = int_to_ptr.vmem [resolvable:$true] %s35
      %38 = dma.hbm_to_vmem [thread:$0]  %s1, 64, %s36, [#allocation3]
    $region9: #{net_apply_padded.1} parent=1 // pred_fallthru
      _
    // Predicated region
    $region10: #{net_apply_padded.1} parent=1 // pred_check
      _
    $region11: #{net_apply_padded.1} parent=1 // pred_check_branch
      %40 = sbr.rel (0) target = $region13
    $region12: #{net_apply_padded.1} parent=1 // pred_region
      %s42 = ssub.s32 16, 16
      %43 = vsyncadd [#allocation6], %s42
      %s45 = sshll.u32 [#allocation5], 4
      %s46 = int_to_ptr.vmem [resolvable:$true] %s45
      %48 = dma.hbm_to_vmem [thread:$0]  %s2, 16, %s46, [#allocation6]
    $region13: #{net_apply_padded.1} parent=1 // pred_fallthru
      _
    // Predicated region
    $region14: #{net_apply_padded.1} parent=1 // pred_check
      _
    $region15: #{net_apply_padded.1} parent=1 // pred_check_branch
      %50 = sbr.rel (0) target = $region17
    $region16: #{net_apply_padded.1} parent=1 // pred_region
      %s52 = ssub.s32 512, 512
      %53 = vsyncadd [#allocation6], %s52
      %s54 = sshll.u32 [#allocation7], 4
      %s55 = int_to_ptr.vmem [resolvable:$true] %s54
      %60 = dma.hbm_to_vmem [thread:$0]  %s3, 512, %s55, [#allocation6], 128, 128, 8
    $region17: #{net_apply_padded.1} parent=1 // pred_fallthru
      _
    // Predicated region
    $region18: #{net_apply_padded.1} parent=1 // pred_check
      _
    $region19: #{net_apply_padded.1} parent=1 // pred_check_branch
      %62 = sbr.rel (0) target = $region21
    $region20: #{net_apply_padded.1} parent=1 // pred_region
      %s64 = ssub.s32 16, 16
      %65 = vsyncadd [#allocation9], %s64
      %s67 = sshll.u32 [#allocation8], 4
      %s68 = int_to_ptr.vmem [resolvable:$true] %s67
      %70 = dma.hbm_to_vmem [thread:$0]  %s4, 16, %s68, [#allocation9]
    $region21: #{net_apply_padded.1} parent=1 // pred_fallthru
      _
    // Predicated region
    $region22: #{net_apply_padded.1} parent=1 // pred_check
      _
    $region23: #{net_apply_padded.1} parent=1 // pred_check_branch
      %72 = sbr.rel (0) target = $region25
    $region24: #{net_apply_padded.1} parent=1 // pred_region
      %s74 = ssub.s32 512, 512
      %75 = vsyncadd [#allocation9], %s74
      %s76 = sshll.u32 [#allocation10], 4
      %s77 = int_to_ptr.vmem [resolvable:$true] %s76
      %82 = dma.hbm_to_vmem [thread:$0]  %s5, 512, %s77, [#allocation9], 128, 128, 8
    $region25: #{net_apply_padded.1} parent=1 // pred_fallthru
      _
    // Predicated region
    $region26: #{net_apply_padded.1} parent=1 // pred_check
      _
    $region27: #{net_apply_padded.1} parent=1 // pred_check_branch
      %84 = sbr.rel (0) target = $region29
    $region28: #{net_apply_padded.1} parent=1 // pred_region
      %s86 = ssub.s32 16, 16
      %87 = vsyncadd [#allocation12], %s86
      %s89 = sshll.u32 [#allocation11], 4
      %s90 = int_to_ptr.vmem [resolvable:$true] %s89
      %92 = dma.hbm_to_vmem [thread:$0]  %s6, 16, %s90, [#allocation12]
    $region29: #{net_apply_padded.1} parent=1 // pred_fallthru
      _
    // Predicated region
    $region30: #{net_apply_padded.1} parent=1 // pred_check
      _
    $region31: #{net_apply_padded.1} parent=1 // pred_check_branch
      %94 = sbr.rel (0) target = $region33
    $region32: #{net_apply_padded.1} parent=1 // pred_region
      %s96 = ssub.s32 512, 512
      %97 = vsyncadd [#allocation12], %s96
      %s98 = sshll.u32 [#allocation13], 4
      %s99 = int_to_ptr.vmem [resolvable:$true] %s98
      %104 = dma.hbm_to_vmem [thread:$0]  %s7, 512, %s99, [#allocation12], 128, 128, 8
    $region33: #{net_apply_padded.1} parent=1 // pred_fallthru
      _
    // Predicated region
    $region34: #{net_apply_padded.1} parent=1 // pred_check
      _
    $region35: #{net_apply_padded.1} parent=1 // pred_check_branch
      %106 = sbr.rel (0) target = $region37
    $region36: #{net_apply_padded.1} parent=1 // pred_region
      %s108 = ssub.s32 16, 16
      %109 = vsyncadd [#allocation15], %s108
      %s111 = sshll.u32 [#allocation14], 4
      %s112 = int_to_ptr.vmem [resolvable:$true] %s111
      %114 = dma.hbm_to_vmem [thread:$0]  %s8, 16, %s112, [#allocation15]
    $region37: #{net_apply_padded.1} parent=1 // pred_fallthru
      _
    // Predicated region
    $region38: #{net_apply_padded.1} parent=1 // pred_check
      _
    $region39: #{net_apply_padded.1} parent=1 // pred_check_branch
      %116 = sbr.rel (0) target = $region41
    $region40: #{net_apply_padded.1} parent=1 // pred_region
      %s118 = ssub.s32 512, 512
      %119 = vsyncadd [#allocation15], %s118
      %s120 = sshll.u32 [#allocation16], 4
      %s121 = int_to_ptr.vmem [resolvable:$true] %s120
      %126 = dma.hbm_to_vmem [thread:$0]  %s9, 512, %s121, [#allocation15], 128, 128, 8
    $region41: #{net_apply_padded.1} parent=1 // pred_fallthru
      _
    // Predicated region
    $region42: #{net_apply_padded.1} parent=1 // pred_check
      _
    $region43: #{net_apply_padded.1} parent=1 // pred_check_branch
      %128 = sbr.rel (0) target = $region45
    $region44: #{net_apply_padded.1} parent=1 // pred_region
      %s130 = ssub.s32 16, 16
      %131 = vsyncadd [#allocation18], %s130
      %s133 = sshll.u32 [#allocation17], 4
      %s134 = int_to_ptr.vmem [resolvable:$true] %s133
      %136 = dma.hbm_to_vmem [thread:$0]  %s10, 16, %s134, [#allocation18]
    $region45: #{net_apply_padded.1} parent=1 // pred_fallthru
      _
    // Predicated region
    $region46: #{net_apply_padded.1} parent=1 // pred_check
      _
    $region47: #{net_apply_padded.1} parent=1 // pred_check_branch
      %138 = sbr.rel (0) target = $region49
    $region48: #{net_apply_padded.1} parent=1 // pred_region
      _
    $region49: #{net_apply_padded.1} parent=1 // pred_fallthru
      _
    // Predicated region
    $region50: #{net_apply_padded.1} parent=1 // pred_check
      _
    $region51: #{net_apply_padded.1} parent=1 // pred_check_branch
      %140 = sbr.rel (0) target = $region53
    $region52: #{net_apply_padded.1} parent=1 // pred_region
      _
    $region53: #{net_apply_padded.1} parent=1 // pred_fallthru
      _
    // Predicated region
    $region54: #{net_apply_padded.1} parent=1 // pred_check
      _
    $region55: #{net_apply_padded.1} parent=1 // pred_check_branch
      %142 = sbr.rel (0) target = $region57
    $region56: #{net_apply_padded.1} parent=1 // pred_region
      %s144 = ssub.s32 512, 512
      %145 = vsyncadd [#allocation18], %s144
      %s146 = sshll.u32 [#allocation19], 4
      %s147 = int_to_ptr.vmem [resolvable:$true] %s146
      %152 = dma.hbm_to_vmem [thread:$0]  %s13, 512, %s147, [#allocation18], 128, 128, 8
    $region57: #{net_apply_padded.1} parent=1 // pred_fallthru
      _
    // Predicated region
    $region58: #{net_apply_padded.1} parent=1 // pred_check
      _
    $region59: #{net_apply_padded.1} parent=1 // pred_check_branch
      %154 = sbr.rel (0) target = $region61
    $region60: #{net_apply_padded.1} parent=1 // pred_region
      _
    $region61: #{net_apply_padded.1} parent=1 // pred_fallthru
      _
    // Predicated region
    $region62: #{net_apply_padded.1} parent=1 // pred_check
      _
    $region63: #{net_apply_padded.1} parent=1 // pred_check_branch
      %156 = sbr.rel (0) target = $region65
    $region64: #{net_apply_padded.1} parent=1 // pred_region
      %157 = dma.done [#allocation3], 64
    $region65: #{net_apply_padded.1} parent=1 // pred_fallthru
      _
    // Predicated region
    $region66: #{net_apply_padded.1} parent=1 // pred_check
      _
    $region67: #{net_apply_padded.1} parent=1 // pred_check_branch
      %159 = sbr.rel (0) target = $region69
    $region68: #{net_apply_padded.1} parent=1 // pred_region
      %160 = dma.done [#allocation6], 16
    $region69: #{net_apply_padded.1} parent=1 // pred_fallthru
      _
    // Predicated region
    $region70: #{net_apply_padded.1} parent=1 // pred_check
      _
    $region71: #{net_apply_padded.1} parent=1 // pred_check_branch
      %162 = sbr.rel (0) target = $region73
    $region72: #{net_apply_padded.1} parent=1 // pred_region
      %163 = dma.done [#allocation6], 512
    $region73: #{net_apply_padded.1} parent=1 // pred_fallthru
      _
    // Predicated region
    $region74: #{net_apply_padded.1} parent=1 // pred_check
      _
    $region75: #{net_apply_padded.1} parent=1 // pred_check_branch
      %165 = sbr.rel (0) target = $region77
    $region76: #{net_apply_padded.1} parent=1 // pred_region
      %166 = dma.done [#allocation9], 16
    $region77: #{net_apply_padded.1} parent=1 // pred_fallthru
      _
    // Predicated region
    $region78: #{net_apply_padded.1} parent=1 // pred_check
      _
    $region79: #{net_apply_padded.1} parent=1 // pred_check_branch
      %168 = sbr.rel (0) target = $region81
    $region80: #{net_apply_padded.1} parent=1 // pred_region
      %169 = dma.done [#allocation9], 512
    $region81: #{net_apply_padded.1} parent=1 // pred_fallthru
      _
    // Predicated region
    $region82: #{net_apply_padded.1} parent=1 // pred_check
      _
    $region83: #{net_apply_padded.1} parent=1 // pred_check_branch
      %171 = sbr.rel (0) target = $region85
    $region84: #{net_apply_padded.1} parent=1 // pred_region
      %172 = dma.done [#allocation12], 16
    $region85: #{net_apply_padded.1} parent=1 // pred_fallthru
      _
    // Predicated region
    $region86: #{net_apply_padded.1} parent=1 // pred_check
      _
    $region87: #{net_apply_padded.1} parent=1 // pred_check_branch
      %174 = sbr.rel (0) target = $region89
    $region88: #{net_apply_padded.1} parent=1 // pred_region
      %175 = dma.done [#allocation12], 512
    $region89: #{net_apply_padded.1} parent=1 // pred_fallthru
      _
    // Predicated region
    $region90: #{net_apply_padded.1} parent=1 // pred_check
      _
    $region91: #{net_apply_padded.1} parent=1 // pred_check_branch
      %177 = sbr.rel (0) target = $region93
    $region92: #{net_apply_padded.1} parent=1 // pred_region
      %178 = dma.done [#allocation15], 16
    $region93: #{net_apply_padded.1} parent=1 // pred_fallthru
      _
    // Predicated region
    $region94: #{net_apply_padded.1} parent=1 // pred_check
      _
    $region95: #{net_apply_padded.1} parent=1 // pred_check_branch
      %180 = sbr.rel (0) target = $region97
    $region96: #{net_apply_padded.1} parent=1 // pred_region
      %181 = dma.done [#allocation15], 512
    $region97: #{net_apply_padded.1} parent=1 // pred_fallthru
      _
    // Predicated region
    $region98: #{net_apply_padded.1} parent=1 // pred_check
      _
    $region99: #{net_apply_padded.1} parent=1 // pred_check_branch
      %183 = sbr.rel (0) target = $region101
    $region100: #{net_apply_padded.1} parent=1 // pred_region
      %184 = dma.done [#allocation18], 16
    $region101: #{net_apply_padded.1} parent=1 // pred_fallthru
      _
    // Predicated region
    $region102: #{net_apply_padded.1} parent=1 // pred_check
      _
    $region103: #{net_apply_padded.1} parent=1 // pred_check_branch
      %186 = sbr.rel (0) target = $region105
    $region104: #{net_apply_padded.1} parent=1 // pred_region
      %187 = dma.done [#allocation18], 512
    $region105: #{net_apply_padded.1} parent=1 // pred_fallthru
      _
    %v188 = vld [vmem:[%s0] sm:$0xff]
    %v189 = vld [vmem:[#allocation2] sm:$0xf]
    %v190 = vld [vmem:[#allocation5] sm:$0x1]
    %192 = vset.pattern.permute.xlu0 0
    %193 = vperm.xlu0 %192, %v188
    %v194 = vpop.permute.xlu0 %193
    %v196 = vlaneseq
    %v197 = vshrl.u32 %v196, 7
    %v198 = vsub.s32 0, %v197
    %v199 = vrot.slane %v189, %v198
    %v200 = vmul.f32 %v194, %v199
    %v202 = vlaneseq
    %v203 = vshrl.u32 %v202, 7
    %v204 = vsub.s32 0, %v203
    %v205 = vrot.slane %v190, %v204
    %v207 = vadd.f32 %v205, %v200
    %208 = vset.pattern.permute.xlu0 1
    %209 = vperm.xlu0 %208, %v188
    %v210 = vpop.permute.xlu0 %209
    %v212 = vlaneseq
    %v213 = vshrl.u32 %v212, 7
    %v214 = vsub.s32 1, %v213
    %v215 = vrot.slane %v189, %v214
    %v216 = vmul.f32 %v210, %v215
    %v217 = vadd.f32 %v207, %v216
    %218 = vset.pattern.permute.xlu0 2
    %219 = vperm.xlu0 %218, %v188
    %v220 = vpop.permute.xlu0 %219
    %v222 = vlaneseq
    %v223 = vshrl.u32 %v222, 7
    %v224 = vsub.s32 2, %v223
    %v225 = vrot.slane %v189, %v224
    %v226 = vmul.f32 %v220, %v225
    %v227 = vadd.f32 %v217, %v226
    %228 = vset.pattern.permute.xlu0 3
    %229 = vperm.xlu0 %228, %v188
    %v230 = vpop.permute.xlu0 %229
    %v232 = vlaneseq
    %v233 = vshrl.u32 %v232, 7
    %v234 = vsub.s32 3, %v233
    %v235 = vrot.slane %v189, %v234
    %v236 = vmul.f32 %v230, %v235
    %v237 = vadd.f32 %v227, %v236
    %vm238 = vcmp.gt.f32.partialorder %v237, 0.0
    %v239 = vmul.f32 %v237, 0.01
    %v240 = vsel %vm238, %v237, %v239
    %v241 = vld [vmem:[#allocation7] sm:$0xff]
    %v242 = vld [vmem:[#allocation7 + $0x8] sm:$0xff]
    %v243 = vld [vmem:[#allocation7 + $0x10] sm:$0xff]
    %v244 = vld [vmem:[#allocation7 + $0x18] sm:$0xff]
    %v245 = vld [vmem:[#allocation8] sm:$0x1]
    %v247 = vlaneseq
    %v248 = vshrl.u32 %v247, 7
    %v249 = vsub.s32 0, %v248
    %v250 = vrot.slane %v245, %v249
    %vm252 = vcmask 261120
    %v254 = vsel %vm252, %v240, 0
    %256 = vmatprep.subr.mxu0 0.0
    %257 = vmatpush1.msra.mxu0 0.0
    %258 = vmatprep.subr.mxu0 0.0
    %259 = vmatpush1.msra.mxu0 0.0
    %260 = vmatprep.subr.mxu0 0.0
    %261 = vmatpush1.msra.mxu0 0.0
    %262 = vmatprep.subr.mxu0 0.0
    %263 = vmatpush1.msra.mxu0 0.0
    %264 = vmatprep.subr.mxu0 0.0
    %265 = vmatpush1.msra.mxu0 0.0
    %266 = vmatprep.subr.mxu0 0.0
    %267 = vmatpush1.msra.mxu0 0.0
    %268 = vmatprep.subr.mxu0 0.0
    %269 = vmatpush1.msra.mxu0 0.0
    %270 = vmatprep.subr.mxu0 0.0
    %271 = vmatpush1.msra.mxu0 0.0
    %272 = vmatprep.subr.mxu0 0.0
    %273 = vmatpush1.msra.mxu0 0.0
    %274 = vmatprep.subr.mxu0 0.0
    %275 = vmatpush1.msra.mxu0 0.0
    %276 = vmatprep.subr.mxu0 0.0
    %277 = vmatpush1.msra.mxu0 0.0
    %278 = vmatprep.subr.mxu0 0.0
    %279 = vmatpush1.msra.mxu0 0.0
    %280 = vmatprep.subr.mxu0 0.0
    %281 = vmatpush1.msra.mxu0 %v244
    %282 = vmatprep.subr.mxu0 0.0
    %283 = vmatpush1.msra.mxu0 %v243
    %284 = vmatprep.subr.mxu0 0.0
    %285 = vmatpush1.msra.mxu0 %v242
    %286 = vmatprep.subr.mxu0 0.0
    %287 = vmatpush1.msra.mxu0 %v241
    %288 = vmatprep.subr.mxu0 0.0
    %289 = vmatpush2.msra.mxu0 0.0
    %290 = vmatprep.subr.mxu0 0.0
    %291 = vmatpush2.msra.mxu0 0.0
    %292 = vmatprep.subr.mxu0 0.0
    %293 = vmatpush2.msra.mxu0 0.0
    %294 = vmatprep.subr.mxu0 0.0
    %295 = vmatpush2.msra.mxu0 0.0
    %296 = vmatprep.subr.mxu0 0.0
    %297 = vmatpush2.msra.mxu0 0.0
    %298 = vmatprep.subr.mxu0 0.0
    %299 = vmatpush2.msra.mxu0 0.0
    %300 = vmatprep.subr.mxu0 0.0
    %301 = vmatpush2.msra.mxu0 0.0
    %302 = vmatprep.subr.mxu0 0.0
    %303 = vmatpush2.msra.mxu0 0.0
    %304 = vmatprep.subr.mxu0 0.0
    %305 = vmatpush2.msra.mxu0 0.0
    %306 = vmatprep.subr.mxu0 0.0
    %307 = vmatpush2.msra.mxu0 0.0
    %308 = vmatprep.subr.mxu0 0.0
    %309 = vmatpush2.msra.mxu0 0.0
    %310 = vmatprep.subr.mxu0 0.0
    %311 = vmatpush2.msra.mxu0 0.0
    %312 = vmatprep.subr.mxu0 0.0
    %313 = vmatpush2.msra.mxu0 0.0
    %314 = vmatprep.subr.mxu0 0.0
    %315 = vmatpush2.msra.mxu0 0.0
    %316 = vmatprep.subr.mxu0 0.0
    %317 = vmatpush2.msra.mxu0 0.0
    %318 = vmatprep.subr.mxu0 0.0
    %319 = vmatpush2.msra.mxu0 0.0
    %320 = vmatprep.mubr.f32.mxu0 0.0
    %321 = vmatmul.mubr.f32.gmra.mxu0 %v254
    %v322 = vpop.f32.mrf.mxu0
    %v323 = vadd.f32 %v250, %v322
    %v324 = vpop.f32.mrf.mxu0
    %325 = vdwg.mxu0
    %vm326 = vcmp.gt.f32.partialorder %v323, 0.0
    %v327 = vmul.f32 %v323, 0.01
    %v328 = vsel %vm326, %v323, %v327
    %v329 = vld [vmem:[#allocation10] sm:$0xff]
    %v330 = vld [vmem:[#allocation10 + $0x8] sm:$0xff]
    %v331 = vld [vmem:[#allocation10 + $0x10] sm:$0xff]
    %v332 = vld [vmem:[#allocation10 + $0x18] sm:$0xff]
    %v333 = vld [vmem:[#allocation11] sm:$0x1]
    %v335 = vlaneseq
    %v336 = vshrl.u32 %v335, 7
    %v337 = vsub.s32 0, %v336
    %v338 = vrot.slane %v333, %v337
    %v341 = vsel %vm252, %v328, 0
    %343 = vmatprep.subr.mxu0 0.0
    %344 = vmatpush1.msra.mxu0 0.0
    %345 = vmatprep.subr.mxu0 0.0
    %346 = vmatpush1.msra.mxu0 0.0
    %347 = vmatprep.subr.mxu0 0.0
    %348 = vmatpush1.msra.mxu0 0.0
    %349 = vmatprep.subr.mxu0 0.0
    %350 = vmatpush1.msra.mxu0 0.0
    %351 = vmatprep.subr.mxu0 0.0
    %352 = vmatpush1.msra.mxu0 0.0
    %353 = vmatprep.subr.mxu0 0.0
    %354 = vmatpush1.msra.mxu0 0.0
    %355 = vmatprep.subr.mxu0 0.0
    %356 = vmatpush1.msra.mxu0 0.0
    %357 = vmatprep.subr.mxu0 0.0
    %358 = vmatpush1.msra.mxu0 0.0
    %359 = vmatprep.subr.mxu0 0.0
    %360 = vmatpush1.msra.mxu0 0.0
    %361 = vmatprep.subr.mxu0 0.0
    %362 = vmatpush1.msra.mxu0 0.0
    %363 = vmatprep.subr.mxu0 0.0
    %364 = vmatpush1.msra.mxu0 0.0
    %365 = vmatprep.subr.mxu0 0.0
    %366 = vmatpush1.msra.mxu0 0.0
    %367 = vmatprep.subr.mxu0 0.0
    %368 = vmatpush1.msra.mxu0 %v332
    %369 = vmatprep.subr.mxu0 0.0
    %370 = vmatpush1.msra.mxu0 %v331
    %371 = vmatprep.subr.mxu0 0.0
    %372 = vmatpush1.msra.mxu0 %v330
    %373 = vmatprep.subr.mxu0 0.0
    %374 = vmatpush1.msra.mxu0 %v329
    %375 = vmatprep.subr.mxu0 0.0
    %376 = vmatpush2.msra.mxu0 0.0
    %377 = vmatprep.subr.mxu0 0.0
    %378 = vmatpush2.msra.mxu0 0.0
    %379 = vmatprep.subr.mxu0 0.0
    %380 = vmatpush2.msra.mxu0 0.0
    %381 = vmatprep.subr.mxu0 0.0
    %382 = vmatpush2.msra.mxu0 0.0
    %383 = vmatprep.subr.mxu0 0.0
    %384 = vmatpush2.msra.mxu0 0.0
    %385 = vmatprep.subr.mxu0 0.0
    %386 = vmatpush2.msra.mxu0 0.0
    %387 = vmatprep.subr.mxu0 0.0
    %388 = vmatpush2.msra.mxu0 0.0
    %389 = vmatprep.subr.mxu0 0.0
    %390 = vmatpush2.msra.mxu0 0.0
    %391 = vmatprep.subr.mxu0 0.0
    %392 = vmatpush2.msra.mxu0 0.0
    %393 = vmatprep.subr.mxu0 0.0
    %394 = vmatpush2.msra.mxu0 0.0
    %395 = vmatprep.subr.mxu0 0.0
    %396 = vmatpush2.msra.mxu0 0.0
    %397 = vmatprep.subr.mxu0 0.0
    %398 = vmatpush2.msra.mxu0 0.0
    %399 = vmatprep.subr.mxu0 0.0
    %400 = vmatpush2.msra.mxu0 0.0
    %401 = vmatprep.subr.mxu0 0.0
    %402 = vmatpush2.msra.mxu0 0.0
    %403 = vmatprep.subr.mxu0 0.0
    %404 = vmatpush2.msra.mxu0 0.0
    %405 = vmatprep.subr.mxu0 0.0
    %406 = vmatpush2.msra.mxu0 0.0
    %407 = vmatprep.mubr.f32.mxu0 0.0
    %408 = vmatmul.mubr.f32.gmra.mxu0 %v341
    %v409 = vpop.f32.mrf.mxu0
    %v410 = vadd.f32 %v338, %v409
    %v411 = vpop.f32.mrf.mxu0
    %412 = vdwg.mxu0
    %vm413 = vcmp.gt.f32.partialorder %v410, 0.0
    %v414 = vmul.f32 %v410, 0.01
    %v415 = vsel %vm413, %v410, %v414
    %v416 = vld [vmem:[#allocation13] sm:$0xff]
    %v417 = vld [vmem:[#allocation13 + $0x8] sm:$0xff]
    %v418 = vld [vmem:[#allocation13 + $0x10] sm:$0xff]
    %v419 = vld [vmem:[#allocation13 + $0x18] sm:$0xff]
    %v420 = vld [vmem:[#allocation14] sm:$0x1]
    %v422 = vlaneseq
    %v423 = vshrl.u32 %v422, 7
    %v424 = vsub.s32 0, %v423
    %v425 = vrot.slane %v420, %v424
    %v428 = vsel %vm252, %v415, 0
    %430 = vmatprep.subr.mxu0 0.0
    %431 = vmatpush1.msra.mxu0 0.0
    %432 = vmatprep.subr.mxu0 0.0
    %433 = vmatpush1.msra.mxu0 0.0
    %434 = vmatprep.subr.mxu0 0.0
    %435 = vmatpush1.msra.mxu0 0.0
    %436 = vmatprep.subr.mxu0 0.0
    %437 = vmatpush1.msra.mxu0 0.0
    %438 = vmatprep.subr.mxu0 0.0
    %439 = vmatpush1.msra.mxu0 0.0
    %440 = vmatprep.subr.mxu0 0.0
    %441 = vmatpush1.msra.mxu0 0.0
    %442 = vmatprep.subr.mxu0 0.0
    %443 = vmatpush1.msra.mxu0 0.0
    %444 = vmatprep.subr.mxu0 0.0
    %445 = vmatpush1.msra.mxu0 0.0
    %446 = vmatprep.subr.mxu0 0.0
    %447 = vmatpush1.msra.mxu0 0.0
    %448 = vmatprep.subr.mxu0 0.0
    %449 = vmatpush1.msra.mxu0 0.0
    %450 = vmatprep.subr.mxu0 0.0
    %451 = vmatpush1.msra.mxu0 0.0
    %452 = vmatprep.subr.mxu0 0.0
    %453 = vmatpush1.msra.mxu0 0.0
    %454 = vmatprep.subr.mxu0 0.0
    %455 = vmatpush1.msra.mxu0 %v419
    %456 = vmatprep.subr.mxu0 0.0
    %457 = vmatpush1.msra.mxu0 %v418
    %458 = vmatprep.subr.mxu0 0.0
    %459 = vmatpush1.msra.mxu0 %v417
    %460 = vmatprep.subr.mxu0 0.0
    %461 = vmatpush1.msra.mxu0 %v416
    %462 = vmatprep.subr.mxu0 0.0
    %463 = vmatpush2.msra.mxu0 0.0
    %464 = vmatprep.subr.mxu0 0.0
    %465 = vmatpush2.msra.mxu0 0.0
    %466 = vmatprep.subr.mxu0 0.0
    %467 = vmatpush2.msra.mxu0 0.0
    %468 = vmatprep.subr.mxu0 0.0
    %469 = vmatpush2.msra.mxu0 0.0
    %470 = vmatprep.subr.mxu0 0.0
    %471 = vmatpush2.msra.mxu0 0.0
    %472 = vmatprep.subr.mxu0 0.0
    %473 = vmatpush2.msra.mxu0 0.0
    %474 = vmatprep.subr.mxu0 0.0
    %475 = vmatpush2.msra.mxu0 0.0
    %476 = vmatprep.subr.mxu0 0.0
    %477 = vmatpush2.msra.mxu0 0.0
    %478 = vmatprep.subr.mxu0 0.0
    %479 = vmatpush2.msra.mxu0 0.0
    %480 = vmatprep.subr.mxu0 0.0
    %481 = vmatpush2.msra.mxu0 0.0
    %482 = vmatprep.subr.mxu0 0.0
    %483 = vmatpush2.msra.mxu0 0.0
    %484 = vmatprep.subr.mxu0 0.0
    %485 = vmatpush2.msra.mxu0 0.0
    %486 = vmatprep.subr.mxu0 0.0
    %487 = vmatpush2.msra.mxu0 0.0
    %488 = vmatprep.subr.mxu0 0.0
    %489 = vmatpush2.msra.mxu0 0.0
    %490 = vmatprep.subr.mxu0 0.0
    %491 = vmatpush2.msra.mxu0 0.0
    %492 = vmatprep.subr.mxu0 0.0
    %493 = vmatpush2.msra.mxu0 0.0
    %494 = vmatprep.mubr.f32.mxu0 0.0
    %495 = vmatmul.mubr.f32.gmra.mxu0 %v428
    %v496 = vpop.f32.mrf.mxu0
    %v497 = vadd.f32 %v425, %v496
    %v498 = vpop.f32.mrf.mxu0
    %499 = vdwg.mxu0
    %vm500 = vcmp.gt.f32.partialorder %v497, 0.0
    %v501 = vmul.f32 %v497, 0.01
    %v502 = vsel %vm500, %v497, %v501
    %v503 = vld [vmem:[#allocation16] sm:$0xff]
    %v504 = vld [vmem:[#allocation16 + $0x8] sm:$0xff]
    %v505 = vld [vmem:[#allocation16 + $0x10] sm:$0xff]
    %v506 = vld [vmem:[#allocation16 + $0x18] sm:$0xff]
    %v507 = vld [vmem:[#allocation17] sm:$0x1]
    %v509 = vlaneseq
    %v510 = vshrl.u32 %v509, 7
    %v511 = vsub.s32 0, %v510
    %v512 = vrot.slane %v507, %v511
    %v515 = vsel %vm252, %v502, 0
    %517 = vmatprep.subr.mxu0 0.0
    %518 = vmatpush1.msra.mxu0 0.0
    %519 = vmatprep.subr.mxu0 0.0
    %520 = vmatpush1.msra.mxu0 0.0
    %521 = vmatprep.subr.mxu0 0.0
    %522 = vmatpush1.msra.mxu0 0.0
    %523 = vmatprep.subr.mxu0 0.0
    %524 = vmatpush1.msra.mxu0 0.0
    %525 = vmatprep.subr.mxu0 0.0
    %526 = vmatpush1.msra.mxu0 0.0
    %527 = vmatprep.subr.mxu0 0.0
    %528 = vmatpush1.msra.mxu0 0.0
    %529 = vmatprep.subr.mxu0 0.0
    %530 = vmatpush1.msra.mxu0 0.0
    %531 = vmatprep.subr.mxu0 0.0
    %532 = vmatpush1.msra.mxu0 0.0
    %533 = vmatprep.subr.mxu0 0.0
    %534 = vmatpush1.msra.mxu0 0.0
    %535 = vmatprep.subr.mxu0 0.0
    %536 = vmatpush1.msra.mxu0 0.0
    %537 = vmatprep.subr.mxu0 0.0
    %538 = vmatpush1.msra.mxu0 0.0
    %539 = vmatprep.subr.mxu0 0.0
    %540 = vmatpush1.msra.mxu0 0.0
    %541 = vmatprep.subr.mxu0 0.0
    %542 = vmatpush1.msra.mxu0 %v506
    %543 = vmatprep.subr.mxu0 0.0
    %544 = vmatpush1.msra.mxu0 %v505
    %545 = vmatprep.subr.mxu0 0.0
    %546 = vmatpush1.msra.mxu0 %v504
    %547 = vmatprep.subr.mxu0 0.0
    %548 = vmatpush1.msra.mxu0 %v503
    %549 = vmatprep.subr.mxu0 0.0
    %550 = vmatpush2.msra.mxu0 0.0
    %551 = vmatprep.subr.mxu0 0.0
    %552 = vmatpush2.msra.mxu0 0.0
    %553 = vmatprep.subr.mxu0 0.0
    %554 = vmatpush2.msra.mxu0 0.0
    %555 = vmatprep.subr.mxu0 0.0
    %556 = vmatpush2.msra.mxu0 0.0
    %557 = vmatprep.subr.mxu0 0.0
    %558 = vmatpush2.msra.mxu0 0.0
    %559 = vmatprep.subr.mxu0 0.0
    %560 = vmatpush2.msra.mxu0 0.0
    %561 = vmatprep.subr.mxu0 0.0
    %562 = vmatpush2.msra.mxu0 0.0
    %563 = vmatprep.subr.mxu0 0.0
    %564 = vmatpush2.msra.mxu0 0.0
    %565 = vmatprep.subr.mxu0 0.0
    %566 = vmatpush2.msra.mxu0 0.0
    %567 = vmatprep.subr.mxu0 0.0
    %568 = vmatpush2.msra.mxu0 0.0
    %569 = vmatprep.subr.mxu0 0.0
    %570 = vmatpush2.msra.mxu0 0.0
    %571 = vmatprep.subr.mxu0 0.0
    %572 = vmatpush2.msra.mxu0 0.0
    %573 = vmatprep.subr.mxu0 0.0
    %574 = vmatpush2.msra.mxu0 0.0
    %575 = vmatprep.subr.mxu0 0.0
    %576 = vmatpush2.msra.mxu0 0.0
    %577 = vmatprep.subr.mxu0 0.0
    %578 = vmatpush2.msra.mxu0 0.0
    %579 = vmatprep.subr.mxu0 0.0
    %580 = vmatpush2.msra.mxu0 0.0
    %581 = vmatprep.mubr.f32.mxu0 0.0
    %582 = vmatmul.mubr.f32.gmra.mxu0 %v515
    %v583 = vpop.f32.mrf.mxu0
    %v584 = vadd.f32 %v512, %v583
    %v585 = vpop.f32.mrf.mxu0
    %586 = vdwg.mxu0
    %vm587 = vcmp.gt.f32.partialorder %v584, 0.0
    %v588 = vmul.f32 %v584, 0.01
    %v589 = vsel %vm587, %v584, %v588
    %v590 = vld [vmem:[%s11] sm:$0xff]
    %v591 = vld [vmem:[%s11 + $0x8] sm:$0xff]
    %v592 = vld [vmem:[%s11 + $0x10] sm:$0xff]
    %v593 = vld [vmem:[%s11 + $0x18] sm:$0xff]
    %v594 = vld [vmem:[%s12] sm:$0x1]
    %v596 = vlaneseq
    %v597 = vshrl.u32 %v596, 7
    %v598 = vsub.s32 0, %v597
    %v599 = vrot.slane %v594, %v598
    %v602 = vsel %vm252, %v589, 0
    %604 = vmatprep.subr.mxu0 0.0
    %605 = vmatpush1.msra.mxu0 0.0
    %606 = vmatprep.subr.mxu0 0.0
    %607 = vmatpush1.msra.mxu0 0.0
    %608 = vmatprep.subr.mxu0 0.0
    %609 = vmatpush1.msra.mxu0 0.0
    %610 = vmatprep.subr.mxu0 0.0
    %611 = vmatpush1.msra.mxu0 0.0
    %612 = vmatprep.subr.mxu0 0.0
    %613 = vmatpush1.msra.mxu0 0.0
    %614 = vmatprep.subr.mxu0 0.0
    %615 = vmatpush1.msra.mxu0 0.0
    %616 = vmatprep.subr.mxu0 0.0
    %617 = vmatpush1.msra.mxu0 0.0
    %618 = vmatprep.subr.mxu0 0.0
    %619 = vmatpush1.msra.mxu0 0.0
    %620 = vmatprep.subr.mxu0 0.0
    %621 = vmatpush1.msra.mxu0 0.0
    %622 = vmatprep.subr.mxu0 0.0
    %623 = vmatpush1.msra.mxu0 0.0
    %624 = vmatprep.subr.mxu0 0.0
    %625 = vmatpush1.msra.mxu0 0.0
    %626 = vmatprep.subr.mxu0 0.0
    %627 = vmatpush1.msra.mxu0 0.0
    %628 = vmatprep.subr.mxu0 0.0
    %629 = vmatpush1.msra.mxu0 %v593
    %630 = vmatprep.subr.mxu0 0.0
    %631 = vmatpush1.msra.mxu0 %v592
    %632 = vmatprep.subr.mxu0 0.0
    %633 = vmatpush1.msra.mxu0 %v591
    %634 = vmatprep.subr.mxu0 0.0
    %635 = vmatpush1.msra.mxu0 %v590
    %636 = vmatprep.subr.mxu0 0.0
    %637 = vmatpush2.msra.mxu0 0.0
    %638 = vmatprep.subr.mxu0 0.0
    %639 = vmatpush2.msra.mxu0 0.0
    %640 = vmatprep.subr.mxu0 0.0
    %641 = vmatpush2.msra.mxu0 0.0
    %642 = vmatprep.subr.mxu0 0.0
    %643 = vmatpush2.msra.mxu0 0.0
    %644 = vmatprep.subr.mxu0 0.0
    %645 = vmatpush2.msra.mxu0 0.0
    %646 = vmatprep.subr.mxu0 0.0
    %647 = vmatpush2.msra.mxu0 0.0
    %648 = vmatprep.subr.mxu0 0.0
    %649 = vmatpush2.msra.mxu0 0.0
    %650 = vmatprep.subr.mxu0 0.0
    %651 = vmatpush2.msra.mxu0 0.0
    %652 = vmatprep.subr.mxu0 0.0
    %653 = vmatpush2.msra.mxu0 0.0
    %654 = vmatprep.subr.mxu0 0.0
    %655 = vmatpush2.msra.mxu0 0.0
    %656 = vmatprep.subr.mxu0 0.0
    %657 = vmatpush2.msra.mxu0 0.0
    %658 = vmatprep.subr.mxu0 0.0
    %659 = vmatpush2.msra.mxu0 0.0
    %660 = vmatprep.subr.mxu0 0.0
    %661 = vmatpush2.msra.mxu0 0.0
    %662 = vmatprep.subr.mxu0 0.0
    %663 = vmatpush2.msra.mxu0 0.0
    %664 = vmatprep.subr.mxu0 0.0
    %665 = vmatpush2.msra.mxu0 0.0
    %666 = vmatprep.subr.mxu0 0.0
    %667 = vmatpush2.msra.mxu0 0.0
    %668 = vmatprep.mubr.f32.mxu0 0.0
    %669 = vmatmul.mubr.f32.gmra.mxu0 %v602
    %v670 = vpop.f32.mrf.mxu0
    %v671 = vadd.f32 %v599, %v670
    %v672 = vpop.f32.mrf.mxu0
    %673 = vdwg.mxu0
    %vm674 = vcmp.gt.f32.partialorder %v671, 0.0
    %v675 = vmul.f32 %v671, 0.01
    %v676 = vsel %vm674, %v671, %v675
    %v677 = vld [vmem:[#allocation19] sm:$0xff]
    %v678 = vld [vmem:[#allocation19 + $0x8] sm:$0xff]
    %v679 = vld [vmem:[#allocation19 + $0x10] sm:$0xff]
    %v680 = vld [vmem:[#allocation19 + $0x18] sm:$0xff]
    %v681 = vld [vmem:[%s14] sm:$0x1]
    %v683 = vlaneseq
    %v684 = vshrl.u32 %v683, 7
    %v685 = vsub.s32 0, %v684
    %v686 = vrot.slane %v681, %v685
    %v689 = vsel %vm252, %v676, 0
    %691 = vmatprep.subr.mxu0 0.0
    %692 = vmatpush1.msra.mxu0 0.0
    %693 = vmatprep.subr.mxu0 0.0
    %694 = vmatpush1.msra.mxu0 0.0
    %695 = vmatprep.subr.mxu0 0.0
    %696 = vmatpush1.msra.mxu0 0.0
    %697 = vmatprep.subr.mxu0 0.0
    %698 = vmatpush1.msra.mxu0 0.0
    %699 = vmatprep.subr.mxu0 0.0
    %700 = vmatpush1.msra.mxu0 0.0
    %701 = vmatprep.subr.mxu0 0.0
    %702 = vmatpush1.msra.mxu0 0.0
    %703 = vmatprep.subr.mxu0 0.0
    %704 = vmatpush1.msra.mxu0 0.0
    %705 = vmatprep.subr.mxu0 0.0
    %706 = vmatpush1.msra.mxu0 0.0
    %707 = vmatprep.subr.mxu0 0.0
    %708 = vmatpush1.msra.mxu0 0.0
    %709 = vmatprep.subr.mxu0 0.0
    %710 = vmatpush1.msra.mxu0 0.0
    %711 = vmatprep.subr.mxu0 0.0
    %712 = vmatpush1.msra.mxu0 0.0
    %713 = vmatprep.subr.mxu0 0.0
    %714 = vmatpush1.msra.mxu0 0.0
    %715 = vmatprep.subr.mxu0 0.0
    %716 = vmatpush1.msra.mxu0 %v680
    %717 = vmatprep.subr.mxu0 0.0
    %718 = vmatpush1.msra.mxu0 %v679
    %719 = vmatprep.subr.mxu0 0.0
    %720 = vmatpush1.msra.mxu0 %v678
    %721 = vmatprep.subr.mxu0 0.0
    %722 = vmatpush1.msra.mxu0 %v677
    %723 = vmatprep.subr.mxu0 0.0
    %724 = vmatpush2.msra.mxu0 0.0
    %725 = vmatprep.subr.mxu0 0.0
    %726 = vmatpush2.msra.mxu0 0.0
    %727 = vmatprep.subr.mxu0 0.0
    %728 = vmatpush2.msra.mxu0 0.0
    %729 = vmatprep.subr.mxu0 0.0
    %730 = vmatpush2.msra.mxu0 0.0
    %731 = vmatprep.subr.mxu0 0.0
    %732 = vmatpush2.msra.mxu0 0.0
    %733 = vmatprep.subr.mxu0 0.0
    %734 = vmatpush2.msra.mxu0 0.0
    %735 = vmatprep.subr.mxu0 0.0
    %736 = vmatpush2.msra.mxu0 0.0
    %737 = vmatprep.subr.mxu0 0.0
    %738 = vmatpush2.msra.mxu0 0.0
    %739 = vmatprep.subr.mxu0 0.0
    %740 = vmatpush2.msra.mxu0 0.0
    %741 = vmatprep.subr.mxu0 0.0
    %742 = vmatpush2.msra.mxu0 0.0
    %743 = vmatprep.subr.mxu0 0.0
    %744 = vmatpush2.msra.mxu0 0.0
    %745 = vmatprep.subr.mxu0 0.0
    %746 = vmatpush2.msra.mxu0 0.0
    %747 = vmatprep.subr.mxu0 0.0
    %748 = vmatpush2.msra.mxu0 0.0
    %749 = vmatprep.subr.mxu0 0.0
    %750 = vmatpush2.msra.mxu0 0.0
    %751 = vmatprep.subr.mxu0 0.0
    %752 = vmatpush2.msra.mxu0 0.0
    %753 = vmatprep.subr.mxu0 0.0
    %754 = vmatpush2.msra.mxu0 0.0
    %755 = vmatprep.mubr.f32.mxu0 0.0
    %756 = vmatmul.mubr.f32.gmra.mxu0 %v689
    %v757 = vpop.f32.mrf.mxu0
    %v758 = vadd.f32 %v686, %v757
    %v759 = vpop.f32.mrf.mxu0
    %760 = vdwg.mxu0
    %761 = vst [vmem:[#allocation20] sm:$0xff] %v758
    // Predicated region
    $region106: #{net_apply_padded.1} parent=1 // pred_check
      _
    $region107: #{net_apply_padded.1} parent=1 // pred_check_branch
      %763 = sbr.rel (0) target = $region109
    $region108: #{net_apply_padded.1} parent=1 // pred_region
      %s765 = ssub.s32 128, 128
      %766 = vsyncadd [#allocation4], %s765
      %s768 = sshll.u32 [#allocation20], 4
      %s769 = int_to_ptr.vmem [resolvable:$true] %s768
      %771 = dma.vmem_to_hbm [thread:$0]  %s769, 128, %s15, [#allocation4]
    $region109: #{net_apply_padded.1} parent=1 // pred_fallthru
      _
    // Predicated region
    $region110: #{net_apply_padded.1} parent=1 // pred_check
      _
    $region111: #{net_apply_padded.1} parent=1 // pred_check_branch
      %773 = sbr.rel (0) target = $region113
    $region112: #{net_apply_padded.1} parent=1 // pred_region
      %774 = dma.done [#allocation4], 128
    $region113: #{net_apply_padded.1} parent=1 // pred_fallthru
      _
    %775 = vsyncpa [#allocation3], 1
    %776 = vsyncpa [#allocation6], 1
    %777 = vsyncpa [#allocation9], 1
    %778 = vsyncpa [#allocation12], 1
    %779 = vsyncpa [#allocation15], 1
    %780 = vsyncpa [#allocation18], 1
    %781 = vsyncpa [#allocation4], 1

</llo_original>
